<compile_context>
chip_gen: v6e
topology: v6e:2x2x1
jax: 0.10.0
libtpu: 0.0.40
codegen_flags: <defaults>
</compile_context>

<pallas_src>
import functools

import jax
import jax.numpy as jnp
from jax.experimental import pallas as pl
from jax.experimental.pallas import tpu as pltpu


def _round_up(x, m):
    return ((x + m - 1) // m) * m


def _cdiv(a, b):
    return (a + b - 1) // b


# ---------------------------------------------------------------------------
# Kernel 1: h = x @ W^T + b   (Linear), tiled over (node rows, feature tiles).
# Bias is added once here (hoisted out of the A reduction entirely).
# ---------------------------------------------------------------------------
def _linear_kernel(x_ref, w_ref, b_ref, h_ref):
    h = jnp.dot(x_ref[...], w_ref[...], preferred_element_type=jnp.float32)
    h_ref[...] = (h + b_ref[...]).astype(h_ref.dtype)


# ---------------------------------------------------------------------------
# Kernel 2a: y = A @ h with h fully VMEM-resident (constant block index);
# the k-tile of h is sliced in-kernel. Accumulates directly into o_ref (f32),
# whose block index is constant across k, so it stays VMEM-resident and is
# written back when the row tile changes.
# ---------------------------------------------------------------------------
def _spmm_resident_kernel(tk, a_ref, h_ref, o_ref):
    k = pl.program_id(1)

    @pl.when(k == 0)
    def _():
        o_ref[...] = jnp.zeros_like(o_ref)

    start = pl.multiple_of(k * tk, 128)          # tk is a multiple of 128
    h_tile = h_ref[pl.ds(start, tk), :]
    # In-kernel cast of the A tile (VPU, hidden under the A DMA); exact for a
    # 0/1 adjacency, no-op when dtypes already match.
    o_ref[...] += jnp.dot(a_ref[...].astype(h_tile.dtype), h_tile,
                          preferred_element_type=jnp.float32)


# ---------------------------------------------------------------------------
# Kernel 2b: fallback when h is too large to keep resident — h streamed per
# k tile via its BlockSpec.
# ---------------------------------------------------------------------------
def _spmm_stream_kernel(a_ref, h_ref, o_ref):
    k = pl.program_id(1)

    @pl.when(k == 0)
    def _():
        o_ref[...] = jnp.zeros_like(o_ref)

    o_ref[...] += jnp.dot(a_ref[...].astype(h_ref.dtype), h_ref[...],
                          preferred_element_type=jnp.float32)


def graph_convolution_layer(x, adjacency_matrix, weight, bias,
                            *, matmul_dtype=jnp.bfloat16,
                            vmem_budget_bytes=40 * 1024 * 1024):
    """Pallas-backed equivalent of the PyTorch GraphConvolutionLayer.forward.

    y = A @ (x @ W^T + b), float32 output.

    matmul_dtype: MXU input dtype for the dominant A @ h product. h is stored
      in this dtype and A tiles are cast to it in-kernel; accumulation is
      always f32. bf16 (default) is exact for a 0/1 adjacency; for weighted /
      normalized adjacencies or very dense graphs pass jnp.float32.
    """
    # --- dtypes (matching the module's .float()) ----------------------------
    x = x.astype(jnp.float32)
    w_t = weight.astype(jnp.float32).T            # [in_features, out_features]
    b = bias.astype(jnp.float32)

    # Adjacency is streamed in its native dtype — no wrapper-side N^2 cast.
    # Only non-float inputs (bool / int) are converted, as .float() requires.
    adj = adjacency_matrix
    if adj.dtype not in (jnp.dtype(jnp.float32), jnp.dtype(jnp.bfloat16)):
        adj = adj.astype(jnp.float32)

    n, in_features = x.shape
    out_features = w_t.shape[1]

    a_itemsize = jnp.dtype(adj.dtype).itemsize
    h_itemsize = jnp.dtype(matmul_dtype).itemsize

    # Lane-dense feature padding (zeros are exact: padded in_features are zero
    # in both contraction operands; padded out_features are sliced off).
    f_pad = _round_up(out_features, 128)
    k_pad = _round_up(in_features, 128)

    # --- tile selection ------------------------------------------------------
    # Row tiles of A / y. Cap tm when out_features is wide so the resident f32
    # output tile stays small, and prefer >=2 row tiles so the parallel row
    # axis can be sharded across v7x's two TensorCores.
    tm_max = 1024
    while tm_max > 16 and 2 * tm_max * f_pad * 4 > 8 * 1024 * 1024:
        tm_max //= 2
    n_row_tiles = _cdiv(n, tm_max)
    if n_row_tiles < 2 and n >= 32:
        n_row_tiles = 2
    tm = _round_up(_cdiv(n, n_row_tiles), 16)     # 16-sublane friendly
    n_rows = n_row_tiles * tm

    # K tiles of A (= row tiles of h): balanced to minimize zero padding and
    # shrunk until the pass-2 VMEM footprint fits the budget.
    tk_cap = 4096 if a_itemsize <= 2 else 2048
    while True:
        n_k_tiles = _cdiv(n, tk_cap)
        tk = _round_up(_cdiv(n, n_k_tiles), 128)
        n_cols = n_k_tiles * tk
        # Keep h fully VMEM-resident when it fits (counted with pessimistic
        # double-buffering); otherwise stream it per k tile.
        h_resident = 2 * n_cols * f_pad * h_itemsize <= 16 * 1024 * 1024
        h_vmem = 2 * (n_cols if h_resident else tk) * f_pad * h_itemsize
        footprint2 = (2 * tm * tk * a_itemsize     # A double buffer
                      + h_vmem                     # h
                      + 2 * tm * f_pad * 4)        # resident f32 output
        if footprint2 <= vmem_budget_bytes or tk_cap <= 128:
            break
        tk_cap //= 2

    # --- zero padding (no-ops when shapes are already aligned) ---------------
    if (n_rows - n) or (n_cols - n):
        adj = jnp.pad(adj, ((0, n_rows - n), (0, n_cols - n)))
    if (n_cols - n) or (k_pad - in_features):
        x = jnp.pad(x, ((0, n_cols - n), (0, k_pad - in_features)))
    if (k_pad - in_features) or (f_pad - out_features):
        w_t = jnp.pad(w_t, ((0, k_pad - in_features), (0, f_pad - out_features)))
    if f_pad - out_features:
        b = jnp.pad(b, (0, f_pad - out_features))
    b = b[None, :]                                 # [1, f_pad]

    # --- Pass 1: h = x @ W^T + b (computed once, lane-dense) -----------------
    tl = 512 if n_cols % 512 == 0 else (256 if n_cols % 256 == 0 else 128)
    tf = 128
    for cand in (512, 256):
        if f_pad % cand == 0 and 2 * k_pad * cand * 4 <= 8 * 1024 * 1024:
            tf = cand
            break
    # TODO(synk): tile the in_features (contraction) axis of pass 1 for very
    # large in_features; it is kept as a single VMEM block here.
    footprint1 = (2 * tl * k_pad * 4 + 2 * k_pad * tf * 4
                  + 2 * tf * 4 + 2 * tl * tf * h_itemsize)
    vmem1 = int(min(max(footprint1 + (8 << 20), 32 << 20), 56 << 20))

    h = pl.pallas_call(
        _linear_kernel,
        out_shape=jax.ShapeDtypeStruct((n_cols, f_pad), matmul_dtype),
        grid_spec=pltpu.PrefetchScalarGridSpec(
            num_scalar_prefetch=0,
            grid=(n_cols // tl, f_pad // tf),
            in_specs=[
                pl.BlockSpec((tl, k_pad), lambda i, j: (i, 0)),    # x rows
                pl.BlockSpec((k_pad, tf), lambda i, j: (0, j)),    # W^T cols
                pl.BlockSpec((1, tf), lambda i, j: (0, j)),        # bias
            ],
            out_specs=pl.BlockSpec((tl, tf), lambda i, j: (i, j)),
        ),
        compiler_params=pltpu.CompilerParams(
            dimension_semantics=("parallel", "parallel"),
            vmem_limit_bytes=vmem1),
    )(x, w_t, b)

    # --- Pass 2: y = A @ h, streaming A (HBM-bound) --------------------------
    if h_resident:
        kernel2 = functools.partial(_spmm_resident_kernel, tk)
        h_spec = pl.BlockSpec((n_cols, f_pad), lambda i, k: (0, 0))   # fetched once
        h_hbm_bytes = n_cols * f_pad * h_itemsize
    else:
        kernel2 = _spmm_stream_kernel
        h_spec = pl.BlockSpec((tk, f_pad), lambda i, k: (k, 0))
        h_hbm_bytes = n_row_tiles * n_cols * f_pad * h_itemsize

    vmem2 = int(min(max(footprint2 + (8 << 20), 32 << 20), 56 << 20))
    flops = 2.0 * n_rows * n_cols * f_pad
    bytes_accessed = (n_rows * n_cols * a_itemsize    # A streamed once
                      + h_hbm_bytes                   # h
                      + n_rows * f_pad * 4)           # y out

    y = pl.pallas_call(
        kernel2,
        out_shape=jax.ShapeDtypeStruct((n_rows, f_pad), jnp.float32),
        grid_spec=pltpu.PrefetchScalarGridSpec(
            num_scalar_prefetch=0,
            grid=(n_rows // tm, n_k_tiles),
            in_specs=[
                pl.BlockSpec((tm, tk), lambda i, k: (i, k)),      # A tile
                h_spec,                                           # h
            ],
            out_specs=pl.BlockSpec((tm, f_pad), lambda i, k: (i, 0)),
        ),
        compiler_params=pltpu.CompilerParams(
            dimension_semantics=("parallel", "arbitrary"),
            vmem_limit_bytes=vmem2),
        cost_estimate=pl.CostEstimate(
            flops=int(flops), transcendentals=0,
            bytes_accessed=int(bytes_accessed)),
    )(adj, h)

    return y[:n, :out_features]


if __name__ == "__main__":
    key = jax.random.PRNGKey(0)

    # ---- Small deterministic problem: 8 nodes, in=32, out=16 ---------------
    N, IN_FEATURES, OUT_FEATURES = 8, 32, 16
    k_x, k_a, k_w, k_b, k2_x, k2_a = jax.random.split(key, 6)

    x = jax.random.normal(k_x, (N, IN_FEATURES), dtype=jnp.float32)
    adjacency = (jax.random.uniform(k_a, (N, N)) > 0.5).astype(jnp.float32)
    weight = jax.random.normal(k_w, (OUT_FEATURES, IN_FEATURES), dtype=jnp.float32) * 0.1
    bias = jax.random.normal(k_b, (OUT_FEATURES,), dtype=jnp.float32) * 0.1

    out = jax.block_until_ready(graph_convolution_layer(x, adjacency, weight, bias))

    ref = adjacency @ (x @ weight.T + bias)
    assert out.shape == (N, OUT_FEATURES)
    assert out.dtype == jnp.float32
    assert jnp.allclose(out, ref, atol=2e-2, rtol=2e-2), "bf16 path mismatch"

    # Exact-precision path.
    out_f32 = jax.block_until_ready(
        graph_convolution_layer(x, adjacency, weight, bias,
                                matmul_dtype=jnp.float32))
    assert jnp.allclose(out_f32, ref, atol=1e-4, rtol=1e-4), "f32 path mismatch"

    # ---- Larger unaligned problem: exercises multi row/k tiles, the resident
    # h dynamic slice, and the padding-minimizing tile selection. ------------
    N2, IN2, OUT2 = 2100, 64, 96
    x2 = jax.random.normal(k2_x, (N2, IN2), dtype=jnp.float32)
    adjacency2 = (jax.random.uniform(k2_a, (N2, N2)) > 0.5).astype(jnp.float32)
    weight2 = jax.random.normal(k_w, (OUT2, IN2), dtype=jnp.float32) * 0.1
    bias2 = jax.random.normal(k_b, (OUT2,), dtype=jnp.float32) * 0.1

    out2 = jax.block_until_ready(
        graph_convolution_layer(x2, adjacency2, weight2, bias2))
    h2 = jnp.matmul(x2, weight2.T, precision="highest") + bias2
    ref2 = jnp.matmul(adjacency2, h2, precision="highest")
    assert out2.shape == (N2, OUT2)
    assert jnp.allclose(out2, ref2, atol=1.0, rtol=2e-2), "large-graph mismatch"

    print("KERNEL_OK")
</pallas_src>

<mosaic_0001>
module attributes {stable_mosaic.version = 11 : i64} {
  func.func @_linear_kernel(%arg0: i32, %arg1: i32, %arg2: memref<128x128xf32, #tpu.memory_space<vmem>>, %arg3: memref<128x128xf32, #tpu.memory_space<vmem>>, %arg4: memref<1x128xf32, #tpu.memory_space<vmem>>, %arg5: memref<128x128xbf16, #tpu.memory_space<vmem>>) attributes {dimension_semantics = [#tpu.dimension_semantics<parallel>, #tpu.dimension_semantics<parallel>], iteration_bounds = array<i64: 1, 1>, scalar_prefetch = 0 : i64, scratch_operands = 0 : i64, tpu.core_type = #tpu.core_type<tc>, window_params = [{transform_indices = @transform_0, window_bounds = array<i64: 128, 128>}, {transform_indices = @transform_1, window_bounds = array<i64: 128, 128>}, {transform_indices = @transform_2, window_bounds = array<i64: 1, 128>}, {transform_indices = @transform_3, window_bounds = array<i64: 128, 128>}]} {
    %c0 = arith.constant 0 : index
    %c0_0 = arith.constant 0 : index
    %0 = vector.load %arg2[%c0, %c0_0] : memref<128x128xf32, #tpu.memory_space<vmem>>, vector<128x128xf32>
    %c0_1 = arith.constant 0 : index
    %c0_2 = arith.constant 0 : index
    %1 = vector.load %arg3[%c0_1, %c0_2] : memref<128x128xf32, #tpu.memory_space<vmem>>, vector<128x128xf32>
    %cst = arith.constant dense<0.000000e+00> : vector<128x128xf32>
    %2 = tpu.matmul %0, %1, %cst {dimension_numbers = #tpu.dot_dimension_numbers<[1], [0], [0], [1], [0, 0, 1, 1], [], []>} : vector<128x128xf32>, vector<128x128xf32>, vector<128x128xf32> -> vector<128x128xf32>
    %c0_3 = arith.constant 0 : index
    %c0_4 = arith.constant 0 : index
    %3 = vector.load %arg4[%c0_3, %c0_4] : memref<1x128xf32, #tpu.memory_space<vmem>>, vector<1x128xf32>
    %4 = vector.broadcast %3 : vector<1x128xf32> to vector<128x128xf32>
    %5 = arith.addf %2, %4 : vector<128x128xf32>
    %6 = arith.truncf %5 : vector<128x128xf32> to vector<128x128xbf16>
    %c0_5 = arith.constant 0 : index
    %c0_6 = arith.constant 0 : index
    %7 = vector.load %arg5[%c0_5, %c0_6] : memref<128x128xbf16, #tpu.memory_space<vmem>>, vector<128x128xbf16>
    tpu.vector_store %arg5[%c0_5, %c0_6], %6 {strides = array<i32>} : memref<128x128xbf16, #tpu.memory_space<vmem>>, vector<128x128xbf16>,
    return
  }
  func.func @transform_0(%arg0: i32, %arg1: i32) -> (i32, i32) {
    %c0_i32 = arith.constant 0 : i32
    %c0_i32_0 = arith.constant 0 : i32
    return %arg0, %c0_i32 : i32, i32
  }
  func.func @transform_1(%arg0: i32, %arg1: i32) -> (i32, i32) {
    %c0_i32 = arith.constant 0 : i32
    %c0_i32_0 = arith.constant 0 : i32
    return %c0_i32, %arg1 : i32, i32
  }
  func.func @transform_2(%arg0: i32, %arg1: i32) -> (i32, i32) {
    %c0_i32 = arith.constant 0 : i32
    %c0_i32_0 = arith.constant 0 : i32
    return %c0_i32, %arg1 : i32, i32
  }
  func.func @transform_3(%arg0: i32, %arg1: i32) -> (i32, i32) {
    %c0_i32 = arith.constant 0 : i32
    return %arg0, %arg1 : i32, i32
  }
}

</mosaic_0001>

<llo_original>
// kernel: tpu_custom_call.1
$region0: #{tpu_custom_call.1}
  #allocation0 [shape = 'u32[]', space=smem, size = 0x4, offset = 0x4, fixed_abs, tag = 'smem constant byte address 0x4 - core index']
  #allocation1 [shape = 'u32[144,128]{1,0:T(1,128)}', space=vmem, size = 0x12000, scoped, tag = 'internal scratch']
  %s0 = inlined_call_operand.hbm [shape: f32[128,128], index: 0, kind: input, shape index: {}]
  %s1 = inlined_call_operand.hbm [shape: f32[128,128], index: 1, kind: input, shape index: {}]
  %s2 = inlined_call_operand.vmem [shape: f32[1,128], index: 2, kind: input, shape index: {}]
  %s3 = inlined_call_operand.hbm [shape: bf16[128,128], index: 3, kind: output, shape index: {}]
  %s4 = sld [smem:[#allocation0]]
  $region30: #{tpu_custom_call.1} parent=0
    _
  %s6 = ssub.s32 1, %s4
  %s7 = scalar_select 0, %s6, %s4
  $region1: #{tpu_custom_call.1} parent=0
    #allocation2 [shape = 'u8[65536]{0}', space=vmem, size = 0x10000, scoped, tag = 'input window, operand 0, single buffered']
    #allocation3 [shape = 's32[1]{0}', space=sflag, size = 0x4, scoped, tag = 'scoped memory for tpu_custom_call.1']
    #allocation4 [shape = 's32[1]{0}', space=sflag, size = 0x4, scoped, tag = 'scoped memory for tpu_custom_call.1']
    #allocation5 [shape = 'u8[65536]{0}', space=vmem, size = 0x10000, scoped, tag = 'input window, operand 1, single buffered']
    #allocation6 [shape = 's32[1]{0}', space=sflag, size = 0x4, scoped, tag = 'scoped memory for tpu_custom_call.1']
    #allocation7 [shape = 'u8[32768]{0}', space=vmem, size = 0x8000, scoped, tag = 'output window, operand 0, single buffered']
    %8 = vsyncpa [#allocation3], 0
    %9 = vsyncpa [#allocation6], 0
    %10 = vsyncpa [#allocation4], 0
    // Predicated region
    $region2: #{tpu_custom_call.1} parent=1 // pred_check
      _
    $region3: #{tpu_custom_call.1} parent=1 // pred_check_branch
      %12 = sbr.rel (0) target = $region5
    $region4: #{tpu_custom_call.1} parent=1 // pred_region
      %s14 = ssub.s32 2048, 2048
      %15 = vsyncadd [#allocation3], %s14
      %s16 = sshll.u32 [#allocation2], 4
      %s17 = int_to_ptr.vmem [resolvable:$true] %s16
      %22 = dma.hbm_to_vmem [thread:$0]  %s0, 2048, %s17, [#allocation3], 128, 128, 8
    $region5: #{tpu_custom_call.1} parent=1 // pred_fallthru
      _
    // Predicated region
    $region6: #{tpu_custom_call.1} parent=1 // pred_check
      _
    $region7: #{tpu_custom_call.1} parent=1 // pred_check_branch
      %24 = sbr.rel (0) target = $region9
    $region8: #{tpu_custom_call.1} parent=1 // pred_region
      %s26 = ssub.s32 2048, 2048
      %27 = vsyncadd [#allocation6], %s26
      %s28 = sshll.u32 [#allocation5], 4
      %s29 = int_to_ptr.vmem [resolvable:$true] %s28
      %34 = dma.hbm_to_vmem [thread:$0]  %s1, 2048, %s29, [#allocation6], 128, 128, 8
    $region9: #{tpu_custom_call.1} parent=1 // pred_fallthru
      _
    // Predicated region
    $region10: #{tpu_custom_call.1} parent=1 // pred_check
      _
    $region11: #{tpu_custom_call.1} parent=1 // pred_check_branch
      %36 = sbr.rel (0) target = $region13
    $region12: #{tpu_custom_call.1} parent=1 // pred_region
      _
    $region13: #{tpu_custom_call.1} parent=1 // pred_fallthru
      _
    // Predicated region
    $region14: #{tpu_custom_call.1} parent=1 // pred_check
      _
    $region15: #{tpu_custom_call.1} parent=1 // pred_check_branch
      %38 = sbr.rel (0) target = $region17
    $region16: #{tpu_custom_call.1} parent=1 // pred_region
      %39 = dma.done [#allocation3], 2048
    $region17: #{tpu_custom_call.1} parent=1 // pred_fallthru
      _
    // Predicated region
    $region18: #{tpu_custom_call.1} parent=1 // pred_check
      _
    $region19: #{tpu_custom_call.1} parent=1 // pred_check_branch
      %41 = sbr.rel (0) target = $region21
    $region20: #{tpu_custom_call.1} parent=1 // pred_region
      %42 = dma.done [#allocation6], 2048
    $region21: #{tpu_custom_call.1} parent=1 // pred_fallthru
      _
    %v43 = vld [vmem:[#allocation2] sm:$0xff]
    %v44 = vld [vmem:[#allocation2 + $0x8] sm:$0xff]
    %v45 = vld [vmem:[#allocation2 + $0x10] sm:$0xff]
    %v46 = vld [vmem:[#allocation2 + $0x18] sm:$0xff]
    %v47 = vld [vmem:[#allocation2 + $0x20] sm:$0xff]
    %v48 = vld [vmem:[#allocation2 + $0x28] sm:$0xff]
    %v49 = vld [vmem:[#allocation2 + $0x30] sm:$0xff]
    %v50 = vld [vmem:[#allocation2 + $0x38] sm:$0xff]
    %v51 = vld [vmem:[#allocation2 + $0x40] sm:$0xff]
    %v52 = vld [vmem:[#allocation2 + $0x48] sm:$0xff]
    %v53 = vld [vmem:[#allocation2 + $0x50] sm:$0xff]
    %v54 = vld [vmem:[#allocation2 + $0x58] sm:$0xff]
    %v55 = vld [vmem:[#allocation2 + $0x60] sm:$0xff]
    %v56 = vld [vmem:[#allocation2 + $0x68] sm:$0xff]
    %v57 = vld [vmem:[#allocation2 + $0x70] sm:$0xff]
    %v58 = vld [vmem:[#allocation2 + $0x78] sm:$0xff]
    %v59 = vld [vmem:[#allocation5] sm:$0xff]
    %v60 = vld [vmem:[#allocation5 + $0x8] sm:$0xff]
    %v61 = vld [vmem:[#allocation5 + $0x10] sm:$0xff]
    %v62 = vld [vmem:[#allocation5 + $0x18] sm:$0xff]
    %v63 = vld [vmem:[#allocation5 + $0x20] sm:$0xff]
    %v64 = vld [vmem:[#allocation5 + $0x28] sm:$0xff]
    %v65 = vld [vmem:[#allocation5 + $0x30] sm:$0xff]
    %v66 = vld [vmem:[#allocation5 + $0x38] sm:$0xff]
    %v67 = vld [vmem:[#allocation5 + $0x40] sm:$0xff]
    %v68 = vld [vmem:[#allocation5 + $0x48] sm:$0xff]
    %v69 = vld [vmem:[#allocation5 + $0x50] sm:$0xff]
    %v70 = vld [vmem:[#allocation5 + $0x58] sm:$0xff]
    %v71 = vld [vmem:[#allocation5 + $0x60] sm:$0xff]
    %v72 = vld [vmem:[#allocation5 + $0x68] sm:$0xff]
    %v73 = vld [vmem:[#allocation5 + $0x70] sm:$0xff]
    %v74 = vld [vmem:[#allocation5 + $0x78] sm:$0xff]
    %v75 = vld [vmem:[%s2] sm:$0x1]
    %v77 = vlaneseq
    %v78 = vshrl.u32 %v77, 7
    %v79 = vsub.s32 0, %v78
    %v80 = vrot.slane %v75, %v79
    %82 = vmatprep.subr.mxu0 0.0
    %83 = vmatpush1.msra.mxu0 %v74
    %84 = vmatprep.subr.mxu0 0.0
    %85 = vmatpush1.msra.mxu0 %v73
    %86 = vmatprep.subr.mxu0 0.0
    %87 = vmatpush1.msra.mxu0 %v72
    %88 = vmatprep.subr.mxu0 0.0
    %89 = vmatpush1.msra.mxu0 %v71
    %90 = vmatprep.subr.mxu0 0.0
    %91 = vmatpush1.msra.mxu0 %v70
    %92 = vmatprep.subr.mxu0 0.0
    %93 = vmatpush1.msra.mxu0 %v69
    %94 = vmatprep.subr.mxu0 0.0
    %95 = vmatpush1.msra.mxu0 %v68
    %96 = vmatprep.subr.mxu0 0.0
    %97 = vmatpush1.msra.mxu0 %v67
    %98 = vmatprep.subr.mxu0 0.0
    %99 = vmatpush1.msra.mxu0 %v66
    %100 = vmatprep.subr.mxu0 0.0
    %101 = vmatpush1.msra.mxu0 %v65
    %102 = vmatprep.subr.mxu0 0.0
    %103 = vmatpush1.msra.mxu0 %v64
    %104 = vmatprep.subr.mxu0 0.0
    %105 = vmatpush1.msra.mxu0 %v63
    %106 = vmatprep.subr.mxu0 0.0
    %107 = vmatpush1.msra.mxu0 %v62
    %108 = vmatprep.subr.mxu0 0.0
    %109 = vmatpush1.msra.mxu0 %v61
    %110 = vmatprep.subr.mxu0 0.0
    %111 = vmatpush1.msra.mxu0 %v60
    %112 = vmatprep.subr.mxu0 0.0
    %113 = vmatpush1.msra.mxu0 %v59
    %114 = vmatprep.subr.mxu0 0.0
    %115 = vmatpush2.msra.mxu0 0.0
    %116 = vmatprep.subr.mxu0 0.0
    %117 = vmatpush2.msra.mxu0 0.0
    %118 = vmatprep.subr.mxu0 0.0
    %119 = vmatpush2.msra.mxu0 0.0
    %120 = vmatprep.subr.mxu0 0.0
    %121 = vmatpush2.msra.mxu0 0.0
    %122 = vmatprep.subr.mxu0 0.0
    %123 = vmatpush2.msra.mxu0 0.0
    %124 = vmatprep.subr.mxu0 0.0
    %125 = vmatpush2.msra.mxu0 0.0
    %126 = vmatprep.subr.mxu0 0.0
    %127 = vmatpush2.msra.mxu0 0.0
    %128 = vmatprep.subr.mxu0 0.0
    %129 = vmatpush2.msra.mxu0 0.0
    %130 = vmatprep.subr.mxu0 0.0
    %131 = vmatpush2.msra.mxu0 0.0
    %132 = vmatprep.subr.mxu0 0.0
    %133 = vmatpush2.msra.mxu0 0.0
    %134 = vmatprep.subr.mxu0 0.0
    %135 = vmatpush2.msra.mxu0 0.0
    %136 = vmatprep.subr.mxu0 0.0
    %137 = vmatpush2.msra.mxu0 0.0
    %138 = vmatprep.subr.mxu0 0.0
    %139 = vmatpush2.msra.mxu0 0.0
    %140 = vmatprep.subr.mxu0 0.0
    %141 = vmatpush2.msra.mxu0 0.0
    %142 = vmatprep.subr.mxu0 0.0
    %143 = vmatpush2.msra.mxu0 0.0
    %144 = vmatprep.subr.mxu0 0.0
    %145 = vmatpush2.msra.mxu0 0.0
    %146 = vmatprep.mubr.f32.mxu0 0.0
    %147 = vmatmul.mubr.f32.gmra.mxu0 %v43
    %v148 = vpop.f32.mrf.mxu0
    %v149 = vadd.f32 %v80, %v148
    %v150 = vpop.f32.mrf.mxu0
    %151 = vmatprep.mubr.f32.mxu0 0.0
    %152 = vmatmul.mubr.f32.gmra.mxu0 %v44
    %v153 = vpop.f32.mrf.mxu0
    %v154 = vadd.f32 %v80, %v153
    %v155 = vpop.f32.mrf.mxu0
    %156 = vmatprep.mubr.f32.mxu0 0.0
    %157 = vmatmul.mubr.f32.gmra.mxu0 %v45
    %v158 = vpop.f32.mrf.mxu0
    %v159 = vadd.f32 %v80, %v158
    %v160 = vpop.f32.mrf.mxu0
    %161 = vmatprep.mubr.f32.mxu0 0.0
    %162 = vmatmul.mubr.f32.gmra.mxu0 %v46
    %v163 = vpop.f32.mrf.mxu0
    %v164 = vadd.f32 %v80, %v163
    %v165 = vpop.f32.mrf.mxu0
    %166 = vmatprep.mubr.f32.mxu0 0.0
    %167 = vmatmul.mubr.f32.gmra.mxu0 %v47
    %v168 = vpop.f32.mrf.mxu0
    %v169 = vadd.f32 %v80, %v168
    %v170 = vpop.f32.mrf.mxu0
    %171 = vmatprep.mubr.f32.mxu0 0.0
    %172 = vmatmul.mubr.f32.gmra.mxu0 %v48
    %v173 = vpop.f32.mrf.mxu0
    %v174 = vadd.f32 %v80, %v173
    %v175 = vpop.f32.mrf.mxu0
    %176 = vmatprep.mubr.f32.mxu0 0.0
    %177 = vmatmul.mubr.f32.gmra.mxu0 %v49
    %v178 = vpop.f32.mrf.mxu0
    %v179 = vadd.f32 %v80, %v178
    %v180 = vpop.f32.mrf.mxu0
    %181 = vmatprep.mubr.f32.mxu0 0.0
    %182 = vmatmul.mubr.f32.gmra.mxu0 %v50
    %v183 = vpop.f32.mrf.mxu0
    %v184 = vadd.f32 %v80, %v183
    %v185 = vpop.f32.mrf.mxu0
    %186 = vmatprep.mubr.f32.mxu0 0.0
    %187 = vmatmul.mubr.f32.gmra.mxu0 %v51
    %v188 = vpop.f32.mrf.mxu0
    %v189 = vadd.f32 %v80, %v188
    %v190 = vpop.f32.mrf.mxu0
    %191 = vmatprep.mubr.f32.mxu0 0.0
    %192 = vmatmul.mubr.f32.gmra.mxu0 %v52
    %v193 = vpop.f32.mrf.mxu0
    %v194 = vadd.f32 %v80, %v193
    %v195 = vpop.f32.mrf.mxu0
    %196 = vmatprep.mubr.f32.mxu0 0.0
    %197 = vmatmul.mubr.f32.gmra.mxu0 %v53
    %v198 = vpop.f32.mrf.mxu0
    %v199 = vadd.f32 %v80, %v198
    %v200 = vpop.f32.mrf.mxu0
    %201 = vmatprep.mubr.f32.mxu0 0.0
    %202 = vmatmul.mubr.f32.gmra.mxu0 %v54
    %v203 = vpop.f32.mrf.mxu0
    %v204 = vadd.f32 %v80, %v203
    %v205 = vpop.f32.mrf.mxu0
    %206 = vmatprep.mubr.f32.mxu0 0.0
    %207 = vmatmul.mubr.f32.gmra.mxu0 %v55
    %v208 = vpop.f32.mrf.mxu0
    %v209 = vadd.f32 %v80, %v208
    %v210 = vpop.f32.mrf.mxu0
    %211 = vmatprep.mubr.f32.mxu0 0.0
    %212 = vmatmul.mubr.f32.gmra.mxu0 %v56
    %v213 = vpop.f32.mrf.mxu0
    %v214 = vadd.f32 %v80, %v213
    %v215 = vpop.f32.mrf.mxu0
    %216 = vmatprep.mubr.f32.mxu0 0.0
    %217 = vmatmul.mubr.f32.gmra.mxu0 %v57
    %v218 = vpop.f32.mrf.mxu0
    %v219 = vadd.f32 %v80, %v218
    %v220 = vpop.f32.mrf.mxu0
    %221 = vmatprep.mubr.f32.mxu0 0.0
    %222 = vmatmul.mubr.f32.gmra.mxu0 %v58
    %v223 = vpop.f32.mrf.mxu0
    %v224 = vadd.f32 %v80, %v223
    %v225 = vpop.f32.mrf.mxu0
    %226 = vdwg.mxu0
    %v227 = vpack.c.bf16 %v154, %v149
    %v228 = vpack.c.bf16 %v164, %v159
    %v229 = vpack.c.bf16 %v174, %v169
    %v230 = vpack.c.bf16 %v184, %v179
    %v231 = vpack.c.bf16 %v194, %v189
    %v232 = vpack.c.bf16 %v204, %v199
    %v233 = vpack.c.bf16 %v214, %v209
    %v234 = vpack.c.bf16 %v224, %v219
    %v243 = vunpack.c.l.b16 %v227
    %v244 = vunpack.c.h.b16 %v227
    %v245 = vunpack.c.l.b16 %v228
    %v246 = vunpack.c.h.b16 %v228
    %v247 = vunpack.c.l.b16 %v229
    %v248 = vunpack.c.h.b16 %v229
    %v249 = vunpack.c.l.b16 %v230
    %v250 = vunpack.c.h.b16 %v230
    %v251 = vunpack.c.l.b16 %v231
    %v252 = vunpack.c.h.b16 %v231
    %v253 = vunpack.c.l.b16 %v232
    %v254 = vunpack.c.h.b16 %v232
    %v255 = vunpack.c.l.b16 %v233
    %v256 = vunpack.c.h.b16 %v233
    %v257 = vunpack.c.l.b16 %v234
    %v258 = vunpack.c.h.b16 %v234
    %v259 = vpack.c.b16 %v243, %v243
    %v260 = vpack.c.b16 %v244, %v244
    %v261 = vpack.c.b16 %v245, %v245
    %v262 = vpack.c.b16 %v246, %v246
    %v263 = vpack.c.b16 %v247, %v247
    %v264 = vpack.c.b16 %v248, %v248
    %v265 = vpack.c.b16 %v249, %v249
    %v266 = vpack.c.b16 %v250, %v250
    %v267 = vpack.c.b16 %v251, %v251
    %v268 = vpack.c.b16 %v252, %v252
    %v269 = vpack.c.b16 %v253, %v253
    %v270 = vpack.c.b16 %v254, %v254
    %v271 = vpack.c.b16 %v255, %v255
    %v272 = vpack.c.b16 %v256, %v256
    %v273 = vpack.c.b16 %v257, %v257
    %v274 = vpack.c.b16 %v258, %v258
    %291 = vst [vmem:[#allocation7] sm:$0xf] %v259
    %292 = vst [vmem:[#allocation7 + $0x4] sm:$0xf] %v260
    %293 = vst [vmem:[#allocation7 + $0x8] sm:$0xf] %v261
    %294 = vst [vmem:[#allocation7 + $0xc] sm:$0xf] %v262
    %295 = vst [vmem:[#allocation7 + $0x10] sm:$0xf] %v263
    %296 = vst [vmem:[#allocation7 + $0x14] sm:$0xf] %v264
    %297 = vst [vmem:[#allocation7 + $0x18] sm:$0xf] %v265
    %298 = vst [vmem:[#allocation7 + $0x1c] sm:$0xf] %v266
    %299 = vst [vmem:[#allocation7 + $0x20] sm:$0xf] %v267
    %300 = vst [vmem:[#allocation7 + $0x24] sm:$0xf] %v268
    %301 = vst [vmem:[#allocation7 + $0x28] sm:$0xf] %v269
    %302 = vst [vmem:[#allocation7 + $0x2c] sm:$0xf] %v270
    %303 = vst [vmem:[#allocation7 + $0x30] sm:$0xf] %v271
    %304 = vst [vmem:[#allocation7 + $0x34] sm:$0xf] %v272
    %305 = vst [vmem:[#allocation7 + $0x38] sm:$0xf] %v273
    %306 = vst [vmem:[#allocation7 + $0x3c] sm:$0xf] %v274
    // Predicated region
    $region22: #{tpu_custom_call.1} parent=1 // pred_check
      _
    $region23: #{tpu_custom_call.1} parent=1 // pred_check_branch
      %308 = sbr.rel (0) target = $region25
    $region24: #{tpu_custom_call.1} parent=1 // pred_region
      %s310 = ssub.s32 1024, 1024
      %311 = vsyncadd [#allocation4], %s310
      %s312 = sshll.u32 [#allocation7], 4
      %s313 = int_to_ptr.vmem [resolvable:$true] %s312
      %318 = dma.vmem_to_hbm [thread:$0]  %s313, 1024, %s3, [#allocation4], 64, 64, 4
    $region25: #{tpu_custom_call.1} parent=1 // pred_fallthru
      _
    // Predicated region
    $region26: #{tpu_custom_call.1} parent=1 // pred_check
      _
    $region27: #{tpu_custom_call.1} parent=1 // pred_check_branch
      %320 = sbr.rel (0) target = $region29
    $region28: #{tpu_custom_call.1} parent=1 // pred_region
      %321 = dma.done [#allocation4], 1024
    $region29: #{tpu_custom_call.1} parent=1 // pred_fallthru
      _
    %322 = vsyncpa [#allocation3], 1
    %323 = vsyncpa [#allocation6], 1
    %324 = vsyncpa [#allocation4], 1

</llo_original>
